<compile_context>
chip_gen: v7x
topology: tpu7x:2x2x1
jax: 0.10.0
libtpu: 0.0.40
codegen_flags: <defaults>
</compile_context>

<pallas_src>
import jax
import jax.numpy as jnp
from jax.experimental import pallas as pl
from jax.experimental.pallas import tpu as pltpu


def _locked_dropout_kernel(mask_ref, x_ref, o_ref):
    # mask_ref: (1, tile_bh) VMEM tile, already scaled by 1/keep_prob (0 or 1/kp).
    # x_ref / o_ref: (tile_t, tile_bh) VMEM tiles.
    o_ref[...] = x_ref[...] * mask_ref[...]


def _chip_config():
    """Per-generation block-size target, scoped-VMEM budget and core-parallel flag."""
    kind = ""
    try:
        kind = jax.devices()[0].device_kind.lower()
    except Exception:
        pass
    if "v7" in kind:
        # 64 MiB physical VMEM: raise the scoped limit to 48 MiB, ~6 MiB blocks.
        return (6 << 20, 48 << 20, 48 << 20, True)
    if "v6" in kind:
        # 32 MiB scoped default: ~4 MiB blocks (4 buffers = 16 MiB) fit untouched.
        return (4 << 20, None, 32 << 20, False)
    # v5e / unknown: 16 MiB scoped default -> stay at ~2 MiB blocks.
    return (2 << 20, None, 16 << 20, False)


def _choose_tiles(T, BH, itemsize, target_bytes, budget_bytes):
    """Pick (tile_t, tile_bh): block ~target_bytes, total pipeline footprint
    (2 in + 2 out buffers + 2 mask rows) under budget_bytes, dtype-aware
    sublane rounding, lane tiles in multiples of 128."""
    sublane = max(8, 32 // max(1, itemsize))  # 8 f32, 16 bf16/f16, 32 int8/fp8

    def pipeline_bytes(tt, tb):
        return 4 * tt * tb * itemsize + 2 * tb * itemsize

    min_t = min(T, sublane)
    tile_bh = BH
    if pipeline_bytes(min_t, tile_bh) > budget_bytes:
        # A single minimum-height full-width block is too big: tile the lane dim.
        denom = itemsize * (4 * min_t + 2)
        tile_bh = max(128, (budget_bytes // denom) // 128 * 128)
        tile_bh = min(tile_bh, BH)

    if T <= sublane:
        tile_t = T  # full-dim exemption from the sublane grain
    else:
        by_target = target_bytes // max(1, tile_bh * itemsize)
        by_budget = (budget_bytes - 2 * tile_bh * itemsize) // max(1, 4 * tile_bh * itemsize)
        tile_t = min(T, max(sublane, min(by_target, by_budget)))
        tile_t = max(sublane, (tile_t // sublane) * sublane)
        tile_t = min(tile_t, T)
    return tile_t, tile_bh


def locked_dropout(x, key, dropout=0.5, training=True):
    """JAX/Pallas equivalent of LockedDropout.forward(x, dropout)."""
    if (not training) or dropout == 0.0:
        return x
    if dropout >= 1.0:
        # keep_prob == 0: every element is dropped (guards the 1/0 scale).
        return jnp.zeros_like(x)

    T, B, H = x.shape
    BH = B * H
    keep_prob = 1.0 - dropout
    itemsize = x.dtype.itemsize

    # One Bernoulli mask of shape (1, B*H), scaled by 1/keep_prob, "locked"
    # (shared) across the seq dimension — identical to the PyTorch module.
    keep = jax.random.bernoulli(key, p=keep_prob, shape=(1, BH))
    mask = jnp.where(keep, jnp.float32(1.0 / keep_prob), jnp.float32(0.0))
    mask = mask.astype(x.dtype)

    x2 = x.reshape(T, BH)

    # Pad the lane dim to a multiple of 128 so every store is unmasked.
    BH_pad = ((BH + 127) // 128) * 128
    if BH_pad != BH:
        x2 = jnp.pad(x2, ((0, 0), (0, BH_pad - BH)))
        mask = jnp.pad(mask, ((0, 0), (0, BH_pad - BH)))

    target_bytes, vmem_limit, scoped_bytes, core_parallel = _chip_config()
    budget_bytes = (scoped_bytes * 3) // 4  # 25% headroom under the scoped limit
    tile_t, tile_bh = _choose_tiles(T, BH_pad, itemsize, target_bytes, budget_bytes)

    grid = (pl.cdiv(T, tile_t), pl.cdiv(BH_pad, tile_bh))

    if core_parallel:
        dim_sem = (pltpu.CORE_PARALLEL, pltpu.ARBITRARY)
    else:
        dim_sem = ("parallel", "arbitrary")

    compiler_params = pltpu.CompilerParams(
        dimension_semantics=dim_sem,
        vmem_limit_bytes=vmem_limit,
    )

    cost = pl.CostEstimate(
        flops=T * BH_pad,
        transcendentals=0,
        bytes_accessed=2 * T * BH_pad * itemsize + BH_pad * itemsize,
    )

    out2 = pl.pallas_call(
        _locked_dropout_kernel,
        out_shape=jax.ShapeDtypeStruct((T, BH_pad), x.dtype),
        grid=grid,
        in_specs=[
            # Mask row: block index depends only on the lane-tile axis.
            pl.BlockSpec((1, tile_bh), lambda t, j: (0, j)),
            pl.BlockSpec((tile_t, tile_bh), lambda t, j: (t, j)),
        ],
        out_specs=pl.BlockSpec((tile_t, tile_bh), lambda t, j: (t, j)),
        compiler_params=compiler_params,
        cost_estimate=cost,
        # Output reuses x's HBM buffer when the caller donates it (footprint win).
        input_output_aliases={1: 0},
    )(mask, x2)

    if BH_pad != BH:
        out2 = out2[:, :BH]
    return out2.reshape(T, B, H)


if __name__ == "__main__":
    key = jax.random.PRNGKey(0)
    kx, kmask = jax.random.split(key)

    # Small shapes consistent with the module; BH = 120 exercises the lane-pad path.
    T, B, H = 8, 3, 40  # (seq_len, batch, hidden)
    x = jax.random.normal(kx, (T, B, H), dtype=jnp.float32)

    out = locked_dropout(x, kmask, dropout=0.5, training=True)
    out = jax.block_until_ready(out)

    # sanity: shape/dtype preserved; mask values are 0 or 1/keep_prob
    assert out.shape == x.shape and out.dtype == x.dtype
    ratio = jnp.where(jnp.abs(x) > 1e-6, out / x, 0.0)
    vals = jax.device_get(jnp.unique(jnp.round(ratio, 3))).tolist()
    assert set(vals) <= {0.0, 2.0}, vals
    # sanity: mask is locked (identical) across the seq axis
    assert bool(jnp.all(jnp.abs(ratio - ratio[0:1]) < 1e-5))

    # eval mode / dropout=0 passthrough
    assert bool(jnp.all(locked_dropout(x, kmask, dropout=0.5, training=False) == x))
    assert bool(jnp.all(locked_dropout(x, kmask, dropout=0.0, training=True) == x))
    # dropout=1.0 guard
    assert bool(jnp.all(locked_dropout(x, kmask, dropout=1.0, training=True) == 0))

    print("KERNEL_OK")
</pallas_src>

<mosaic_0001>
module attributes {stable_mosaic.version = 11 : i64} {
  func.func @_locked_dropout_kernel(%arg0: i32, %arg1: i32, %arg2: memref<1x128xf32, #tpu.memory_space<vmem>>, %arg3: memref<8x128xf32, #tpu.memory_space<vmem>>, %arg4: memref<8x128xf32, #tpu.memory_space<vmem>>) attributes {dimension_semantics = [#tpu.dimension_semantics<parallel>, #tpu.dimension_semantics<arbitrary>], iteration_bounds = array<i64: 1, 1>, scalar_prefetch = 0 : i64, scratch_operands = 0 : i64, tpu.core_type = #tpu.core_type<tc>, window_params = [{transform_indices = @transform_0, window_bounds = array<i64: 1, 128>}, {transform_indices = @transform_1, window_bounds = array<i64: 8, 128>}, {transform_indices = @transform_2, window_bounds = array<i64: 8, 128>}]} {
    %c0 = arith.constant 0 : index
    %c0_0 = arith.constant 0 : index
    %0 = vector.load %arg3[%c0, %c0_0] : memref<8x128xf32, #tpu.memory_space<vmem>>, vector<8x128xf32>
    %c0_1 = arith.constant 0 : index
    %c0_2 = arith.constant 0 : index
    %1 = vector.load %arg2[%c0_1, %c0_2] : memref<1x128xf32, #tpu.memory_space<vmem>>, vector<1x128xf32>
    %2 = vector.broadcast %1 : vector<1x128xf32> to vector<8x128xf32>
    %3 = arith.mulf %0, %2 : vector<8x128xf32>
    %c0_3 = arith.constant 0 : index
    %c0_4 = arith.constant 0 : index
    %4 = vector.load %arg4[%c0_3, %c0_4] : memref<8x128xf32, #tpu.memory_space<vmem>>, vector<8x128xf32>
    tpu.vector_store %arg4[%c0_3, %c0_4], %3 {strides = array<i32>} : memref<8x128xf32, #tpu.memory_space<vmem>>, vector<8x128xf32>,
    return
  }
  func.func @transform_0(%arg0: i32, %arg1: i32) -> (i32, i32) {
    %c0_i32 = arith.constant 0 : i32
    %c0_i32_0 = arith.constant 0 : i32
    return %c0_i32, %arg1 : i32, i32
  }
  func.func @transform_1(%arg0: i32, %arg1: i32) -> (i32, i32) {
    %c0_i32 = arith.constant 0 : i32
    return %arg0, %arg1 : i32, i32
  }
  func.func @transform_2(%arg0: i32, %arg1: i32) -> (i32, i32) {
    %c0_i32 = arith.constant 0 : i32
    return %arg0, %arg1 : i32, i32
  }
}

</mosaic_0001>

<llo_original>
// kernel: tpu_custom_call.1
$region0: #{tpu_custom_call.1}
  #allocation0 [shape = 'u32[]', space=smem, size = 0x4, offset = 0x4, fixed_abs, tag = 'smem constant byte address 0x4 - core index']
  #allocation1 [shape = 'u32[144,128]{1,0:T(1,128)}', space=vmem, size = 0x12000, scoped, tag = 'internal scratch']
  %s0 = inlined_call_operand.vmem [shape: f32[1,128], index: 0, kind: input, shape index: {}]
  %s1 = inlined_call_operand.hbm [shape: f32[8,128], index: 1, kind: input, shape index: {}, may-alias: {1,2}]
  %s2 = inlined_call_operand.hbm [shape: f32[8,128], index: 2, kind: output, shape index: {}, may-alias: {1,2}]
  %s3 = sld [smem:[#allocation0]]
  $region22: #{tpu_custom_call.1} parent=0
    _
  %s5 = ssub.s32 1, %s3
  %s6 = scalar_select 0, %s5, %s3
  $region1: #{tpu_custom_call.1} parent=0
    #allocation2 [shape = 'u8[4096]{0}', space=vmem, size = 0x1000, scoped, tag = 'input window, operand 1, single buffered']
    #allocation3 [shape = 's32[1]{0}', space=sflag, size = 0x4, scoped, tag = 'scoped memory for tpu_custom_call.1']
    #allocation4 [shape = 's32[1]{0}', space=sflag, size = 0x4, scoped, tag = 'scoped memory for tpu_custom_call.1']
    #allocation5 [shape = 'u8[4096]{0}', space=vmem, size = 0x1000, scoped, tag = 'output window, operand 0, single buffered']
    %7 = vsyncpa [#allocation3], 0
    %8 = vsyncpa [#allocation4], 0
    // Predicated region
    $region2: #{tpu_custom_call.1} parent=1 // pred_check
      _
    $region3: #{tpu_custom_call.1} parent=1 // pred_check_branch
      %10 = sbr.rel (0) target = $region5
    $region4: #{tpu_custom_call.1} parent=1 // pred_region
      _
    $region5: #{tpu_custom_call.1} parent=1 // pred_fallthru
      _
    // Predicated region
    $region6: #{tpu_custom_call.1} parent=1 // pred_check
      _
    $region7: #{tpu_custom_call.1} parent=1 // pred_check_branch
      %12 = sbr.rel (0) target = $region9
    $region8: #{tpu_custom_call.1} parent=1 // pred_region
      %s14 = ssub.s32 128, 128
      %15 = vsyncadd [#allocation3], %s14
      %s17 = sshll.u32 [#allocation2], 4
      %s18 = int_to_ptr.vmem [resolvable:$true] %s17
      %20 = dma.hbm_to_vmem [thread:$0]  %s1, 128, %s18, [#allocation3]
    $region9: #{tpu_custom_call.1} parent=1 // pred_fallthru
      _
    // Predicated region
    $region10: #{tpu_custom_call.1} parent=1 // pred_check
      _
    $region11: #{tpu_custom_call.1} parent=1 // pred_check_branch
      %22 = sbr.rel (0) target = $region13
    $region12: #{tpu_custom_call.1} parent=1 // pred_region
      %23 = dma.done [#allocation3], 128
    $region13: #{tpu_custom_call.1} parent=1 // pred_fallthru
      _
    %v24 = vld [vmem:[#allocation2] sm:$0xff]
    %v25 = vld [vmem:[%s0] sm:$0x1]
    %v27 = vlaneseq
    %v28 = vshrl.u32 %v27, 7
    %v29 = vsub.s32 0, %v28
    %v30 = vrot.slane %v25, %v29
    %v32 = vmul.f32 %v24, %v30
    %33 = vst [vmem:[#allocation5] sm:$0xff] %v32
    // Predicated region
    $region14: #{tpu_custom_call.1} parent=1 // pred_check
      _
    $region15: #{tpu_custom_call.1} parent=1 // pred_check_branch
      %35 = sbr.rel (0) target = $region17
    $region16: #{tpu_custom_call.1} parent=1 // pred_region
      %s37 = ssub.s32 128, 128
      %38 = vsyncadd [#allocation4], %s37
      %s40 = sshll.u32 [#allocation5], 4
      %s41 = int_to_ptr.vmem [resolvable:$true] %s40
      %43 = dma.vmem_to_hbm [thread:$0]  %s41, 128, %s2, [#allocation4]
    $region17: #{tpu_custom_call.1} parent=1 // pred_fallthru
      _
    // Predicated region
    $region18: #{tpu_custom_call.1} parent=1 // pred_check
      _
    $region19: #{tpu_custom_call.1} parent=1 // pred_check_branch
      %45 = sbr.rel (0) target = $region21
    $region20: #{tpu_custom_call.1} parent=1 // pred_region
      %46 = dma.done [#allocation4], 128
    $region21: #{tpu_custom_call.1} parent=1 // pred_fallthru
      _
    %47 = vsyncpa [#allocation3], 1
    %48 = vsyncpa [#allocation4], 1

</llo_original>
